<compile_context>
chip_gen: v7x
topology: tpu7x:2x2x1
jax: 0.10.0
libtpu: 0.0.40
codegen_flags: <defaults>
</compile_context>

<pallas_src>
import functools

import jax
import jax.numpy as jnp
from jax import lax
from jax.experimental import pallas as pl
from jax.experimental.pallas import tpu as pltpu


def _round_up(v, m):
    return (v + m - 1) // m * m


def _pad2(arr, rows, cols):
    r, c = arr.shape
    return jnp.pad(arr, ((0, rows - r), (0, cols - c)))


# ----------------------------------------------------------------------------
# Pass 1: per-in-feature DoRA scale  s = m / ||W + alpha*(A@B)^T||_col
# Grid: (in_tiles, out_tiles); the out axis is the trailing reduction.
# Square-and-accumulate is chunked over sublane row blocks to bound vreg
# pressure (no full (tn, tk) f32 temporary).
# ----------------------------------------------------------------------------
def _dora_scale_kernel(w_ref, bt_ref, a_ref, m_ref, scale_ref, acc_ref, *,
                       alpha, row_chunk):
    k = pl.program_id(1)

    @pl.when(k == 0)
    def _():
        acc_ref[...] = jnp.zeros_like(acc_ref)

    a_tile = a_ref[...].astype(jnp.float32)             # (tk, rank)
    tk = w_ref.shape[1]
    n_chunks = w_ref.shape[0] // row_chunk

    def body(r, acc):
        r0 = pl.multiple_of(r * row_chunk, row_chunk)
        bt_blk = bt_ref[pl.ds(r0, row_chunk), :].astype(jnp.float32)   # (rc, rank)
        # lora.T chunk, shape (rc, tk): contract the rank dims (NT feed).
        lora_t = lax.dot_general(
            bt_blk, a_tile,
            dimension_numbers=(((1,), (1,)), ((), ())),
            preferred_element_type=jnp.float32,
        )
        v = w_ref[pl.ds(r0, row_chunk), :].astype(jnp.float32) + alpha * lora_t
        return acc + jnp.sum(v * v, axis=0, keepdims=True)

    acc_ref[...] += lax.fori_loop(0, n_chunks, body,
                                  jnp.zeros((1, tk), jnp.float32))

    @pl.when(k == pl.num_programs(1) - 1)
    def _():
        sumsq = acc_ref[...]
        # rsqrt on the EUP; zero (padded) columns -> scale 0, not NaN/Inf.
        scale = m_ref[...].astype(jnp.float32) * lax.rsqrt(sumsq)
        scale_ref[...] = jnp.where(sumsq > 0.0, scale, 0.0)


# ----------------------------------------------------------------------------
# Pass 2: y = (x*s) @ W^T + alpha*xa @ B^T + bias,  xa = (x*s)@A precomputed.
# Grid: (batch_tiles, out_tiles, in_tiles); in axis is the K reduction.
# W stays in native (out, in) layout -> NT dot_general feed (no HBM transpose).
# ----------------------------------------------------------------------------
def _dora_gemm_kernel(scale_ref, x_ref, w_ref, xa_ref, bt_ref, bias_ref, o_ref,
                      acc_ref, *, alpha):
    k = pl.program_id(2)

    @pl.when(k == 0)
    def _():
        acc_ref[...] = jnp.zeros_like(acc_ref)

    # Fold the DoRA column scale into the activation in f32 (v5e-safe vector
    # math), then cast to the MXU operand dtype (bf16 when enabled).
    xs = (x_ref[...].astype(jnp.float32) * scale_ref[...]).astype(w_ref.dtype)

    # Main streamed GEMM against native-layout W (out, in): contract in-dims.
    acc_ref[...] += lax.dot_general(
        xs, w_ref[...],
        dimension_numbers=(((1,), (1,)), ((), ())),
        preferred_element_type=jnp.float32,
    )

    @pl.when(k == pl.num_programs(2) - 1)
    def _():
        # alpha * ((x*s)@A) @ B, using precomputed xa and B^T (out_tile, rank).
        lora_y = lax.dot_general(
            xa_ref[...].astype(jnp.float32), bt_ref[...].astype(jnp.float32),
            dimension_numbers=(((1,), (1,)), ((), ())),
            preferred_element_type=jnp.float32,
        )
        y = acc_ref[...] + alpha * lora_y + bias_ref[...].astype(jnp.float32)
        o_ref[...] = y.astype(o_ref.dtype)


# ----------------------------------------------------------------------------
# Pass 1 wrapper. x-independent: compute once per weight update and cache.
# Returns the (1, in_features) f32 column scale.
# ----------------------------------------------------------------------------
def dora_column_scale(w, a, b, m, *, alpha, bn=256, bk=512):
    out_f, in_f = w.shape
    rank = a.shape[1]

    tk = min(bk, _round_up(in_f, 128))
    tn = min(bn, _round_up(out_f, 8))
    in_p = _round_up(in_f, tk)
    out_p = _round_up(out_f, tn)

    # Prefer >=2 blocks along the parallel (in) axis so both v7x TCs are used.
    if in_p // tk == 1 and in_p % 256 == 0:
        tk = in_p // 2

    w_p = _pad2(w, out_p, in_p)                         # (out, in) native layout
    a_p = _pad2(a, in_p, rank)                          # (in, rank)
    bt_p = _pad2(jnp.swapaxes(b, 0, 1), out_p, rank)    # (out, rank), tiny
    m_p = _pad2(m, 1, in_p)

    row_chunk = 32 if tn % 32 == 0 else 8

    scale = pl.pallas_call(
        functools.partial(_dora_scale_kernel, alpha=alpha, row_chunk=row_chunk),
        out_shape=jax.ShapeDtypeStruct((1, in_p), jnp.float32),
        grid_spec=pltpu.PrefetchScalarGridSpec(
            num_scalar_prefetch=0,
            grid=(in_p // tk, out_p // tn),
            in_specs=[
                pl.BlockSpec((tn, tk), lambda i, k: (k, i)),     # W  (out, in)
                pl.BlockSpec((tn, rank), lambda i, k: (k, 0)),   # B^T (out, rank)
                pl.BlockSpec((tk, rank), lambda i, k: (i, 0)),   # A  (in, rank)
                pl.BlockSpec((1, tk), lambda i, k: (0, i)),      # m  (1, in)
            ],
            out_specs=pl.BlockSpec((1, tk), lambda i, k: (0, i)),
            scratch_shapes=[pltpu.VMEM((1, tk), jnp.float32)],
        ),
        compiler_params=pltpu.CompilerParams(
            dimension_semantics=("parallel", "arbitrary"),
            vmem_limit_bytes=32 * 1024 * 1024,
        ),
    )(w_p, bt_p, a_p, m_p)

    return scale[:, :in_f]


# ----------------------------------------------------------------------------
# Full forward. Pass `scale=` to reuse a cached pass-1 result; set
# `mxu_dtype=jnp.bfloat16` for bf16 MXU operands (f32 accumulation).
# ----------------------------------------------------------------------------
def dora_linear_merged(x, w, a, b, m, bias, *, alpha, scale=None, mxu_dtype=None,
                       bm=512, bn=1024, bk=1024):
    """x:(B,In) w:(Out,In) a:(In,r) b:(r,Out) m:(1,In) bias:(1,Out) -> (B,Out)."""
    batch, in_f = x.shape
    out_f = w.shape[0]
    rank = a.shape[1]

    if scale is None:
        scale = dora_column_scale(w, a, b, m, alpha=alpha)   # (1, in_f) f32

    # ---- TPU-aligned tiles (lane -> 128, sublane -> 8) and padding ----
    tm = min(bm, _round_up(batch, 8))
    tk = min(bk, _round_up(in_f, 128))
    tn = min(bn, _round_up(out_f, 128))
    batch_p = _round_up(batch, tm)
    in_p = _round_up(in_f, tk)
    out_p = _round_up(out_f, tn)

    # Prefer >=2 blocks along a parallel axis (v7x has 2 TensorCores).
    if batch_p // tm == 1 and out_p // tn == 1 and out_p % 256 == 0:
        tn = out_p // 2

    x_p = _pad2(x, batch_p, in_p)
    w_p = _pad2(w, out_p, in_p)                          # native (out, in); no transpose
    a_p = _pad2(a, in_p, rank)
    bt_p = _pad2(jnp.swapaxes(b, 0, 1), out_p, rank)     # (out, rank), rank-sized
    bias_p = _pad2(bias, 1, out_p)
    scale_p = _pad2(scale.astype(jnp.float32), 1, in_p)

    out_dtype = x.dtype
    if mxu_dtype is not None:
        x_p = x_p.astype(mxu_dtype)
        w_p = w_p.astype(mxu_dtype)

    # Hoisted LoRA projection: xa = (x*s) @ A. Rank-sized GEMM, plain XLA is
    # fine here; removing it from the (j,k) kernel loops saves a full MXU
    # column pass per K step.
    xa = jnp.dot(x_p.astype(jnp.float32) * scale_p, a_p.astype(jnp.float32),
                 preferred_element_type=jnp.float32)      # (batch_p, rank) f32

    num_k = in_p // tk

    # Decode-like shapes (tiny batch tile): deepen W buffering to hide DMA.
    w_index_map = lambda i, j, k: (j, k)
    if tm <= 16 and num_k >= 2:
        try:
            w_spec = pl.BlockSpec((tn, tk), w_index_map,
                                  pipeline_mode=pl.Buffered(3))
        except (TypeError, AttributeError):
            w_spec = pl.BlockSpec((tn, tk), w_index_map)
    else:
        w_spec = pl.BlockSpec((tn, tk), w_index_map)

    y_p = pl.pallas_call(
        functools.partial(_dora_gemm_kernel, alpha=alpha),
        out_shape=jax.ShapeDtypeStruct((batch_p, out_p), out_dtype),
        grid_spec=pltpu.PrefetchScalarGridSpec(
            num_scalar_prefetch=0,
            grid=(batch_p // tm, out_p // tn, num_k),
            in_specs=[
                pl.BlockSpec((1, tk), lambda i, j, k: (0, k)),      # scale
                pl.BlockSpec((tm, tk), lambda i, j, k: (i, k)),     # x
                w_spec,                                             # W (out, in)
                pl.BlockSpec((tm, rank), lambda i, j, k: (i, 0)),   # xa
                pl.BlockSpec((tn, rank), lambda i, j, k: (j, 0)),   # B^T
                pl.BlockSpec((1, tn), lambda i, j, k: (0, j)),      # bias
            ],
            out_specs=pl.BlockSpec((tm, tn), lambda i, j, k: (i, j)),
            scratch_shapes=[pltpu.VMEM((tm, tn), jnp.float32)],
        ),
        compiler_params=pltpu.CompilerParams(
            dimension_semantics=("parallel", "parallel", "arbitrary"),
            vmem_limit_bytes=48 * 1024 * 1024,
        ),
    )(scale_p, x_p, w_p, xa, bt_p, bias_p)

    return y_p[:batch, :out_f]


# ----------------------------------------------------------------------------
# Pure-JAX reference (mirrors the PyTorch forward exactly).
# ----------------------------------------------------------------------------
def _reference(x, w, a, b, m, bias, *, alpha):
    lora = a @ b
    v = w + alpha * lora.T
    col_norm = jnp.linalg.norm(v, axis=0, keepdims=True)
    new_w = m * (v / col_norm)
    return x @ new_w.T + bias


if __name__ == "__main__":
    alpha = 2.0

    def make_inputs(key, batch, in_f, out_f, rank):
        kx, kw, ka, kb, kbias = jax.random.split(key, 5)
        x = jax.random.normal(kx, (batch, in_f), dtype=jnp.float32)
        w = jax.random.normal(kw, (out_f, in_f), dtype=jnp.float32) * 0.1
        a = jax.random.normal(ka, (in_f, rank), dtype=jnp.float32) * 0.05
        b = jax.random.normal(kb, (rank, out_f), dtype=jnp.float32) * 0.05
        bias = jax.random.normal(kbias, (1, out_f), dtype=jnp.float32) * 0.1
        m = jnp.linalg.norm(w, axis=0, keepdims=True)     # DoRA init: column norms
        return x, w, a, b, m, bias

    # 1) Small single-tile shapes (default tiles, f32 end-to-end).
    x, w, a, b, m, bias = make_inputs(jax.random.PRNGKey(0),
                                      batch=8, in_f=32, out_f=16, rank=4)
    out = jax.block_until_ready(dora_linear_merged(x, w, a, b, m, bias, alpha=alpha))
    ref = _reference(x, w, a, b, m, bias, alpha=alpha)
    assert out.shape == ref.shape
    assert jnp.allclose(out, ref, atol=1e-4, rtol=1e-4), "mismatch (small)"

    # 2) Multi-tile grid with K reduction + cached (x-independent) scale reuse.
    x2, w2, a2, b2, m2, bias2 = make_inputs(jax.random.PRNGKey(0),
                                            batch=24, in_f=384, out_f=256, rank=4)
    s2 = dora_column_scale(w2, a2, b2, m2, alpha=alpha)   # cache across forwards
    out2 = jax.block_until_ready(
        dora_linear_merged(x2, w2, a2, b2, m2, bias2, alpha=alpha, scale=s2,
                           bm=8, bn=128, bk=128))
    ref2 = _reference(x2, w2, a2, b2, m2, bias2, alpha=alpha)
    assert out2.shape == ref2.shape
    assert jnp.allclose(out2, ref2, atol=1e-4, rtol=1e-4), "mismatch (tiled)"

    # 3) bf16 MXU operands (f32 accumulate / f32 vector math), loose tolerance.
    out3 = jax.block_until_ready(
        dora_linear_merged(x2, w2, a2, b2, m2, bias2, alpha=alpha, scale=s2,
                           mxu_dtype=jnp.bfloat16, bm=8, bn=128, bk=128))
    assert out3.shape == ref2.shape
    assert jnp.allclose(out3, ref2, atol=2e-1, rtol=5e-2), "mismatch (bf16 MXU)"

    print("KERNEL_OK")
</pallas_src>

<mosaic_0001>
module attributes {stable_mosaic.version = 11 : i64} {
  func.func @_dora_scale_kernel(%arg0: i32, %arg1: i32, %arg2: memref<16x128xf32, #tpu.memory_space<vmem>>, %arg3: memref<16x4xf32, #tpu.memory_space<vmem>>, %arg4: memref<128x4xf32, #tpu.memory_space<vmem>>, %arg5: memref<1x128xf32, #tpu.memory_space<vmem>>, %arg6: memref<1x128xf32, #tpu.memory_space<vmem>>, %arg7: memref<1x128xf32, #tpu.memory_space<vmem>>) attributes {dimension_semantics = [#tpu.dimension_semantics<parallel>, #tpu.dimension_semantics<arbitrary>], iteration_bounds = array<i64: 1, 1>, scalar_prefetch = 0 : i64, scratch_operands = 1 : i64, tpu.core_type = #tpu.core_type<tc>, window_params = [{transform_indices = @transform_0, window_bounds = array<i64: 16, 128>}, {transform_indices = @transform_1, window_bounds = array<i64: 16, 4>}, {transform_indices = @transform_2, window_bounds = array<i64: 128, 4>}, {transform_indices = @transform_3, window_bounds = array<i64: 1, 128>}, {transform_indices = @transform_4, window_bounds = array<i64: 1, 128>}]} {
    %c0_i32 = arith.constant 0 : i32
    %0 = arith.cmpi eq, %arg1, %c0_i32 : i32
    %1 = arith.extui %0 : i1 to i32
    %c0_i32_0 = arith.constant 0 : i32
    %2 = arith.cmpi ne, %1, %c0_i32_0 : i32
    scf.if %2 {
      %cst_10 = arith.constant 0.000000e+00 : f32
      %13 = vector.broadcast %cst_10 : f32 to vector<1x128xf32>
      %c0_11 = arith.constant 0 : index
      %c0_12 = arith.constant 0 : index
      %14 = vector.load %arg7[%c0_11, %c0_12] : memref<1x128xf32, #tpu.memory_space<vmem>>, vector<1x128xf32>
      tpu.vector_store %arg7[%c0_11, %c0_12], %13 {strides = array<i32>} : memref<1x128xf32, #tpu.memory_space<vmem>>, vector<1x128xf32>,
    } else {
    }
    %c0 = arith.constant 0 : index
    %c0_1 = arith.constant 0 : index
    %3 = vector.load %arg4[%c0, %c0_1] : memref<128x4xf32, #tpu.memory_space<vmem>>, vector<128x4xf32>
    %c0_2 = arith.constant 0 : index
    %c0_3 = arith.constant 0 : index
    %4 = vector.load %arg7[%c0_2, %c0_3] : memref<1x128xf32, #tpu.memory_space<vmem>>, vector<1x128xf32>
    %cst = arith.constant 0.000000e+00 : f32
    %5 = vector.broadcast %cst : f32 to vector<1x128xf32>
    %c0_i32_4 = arith.constant 0 : i32
    %c2_i32 = arith.constant 2 : i32
    %6 = arith.addi %c0_i32_4, %c2_i32 : i32
    %c1_i32 = arith.constant 1 : i32
    %7 = scf.for %arg8 = %c0_i32_4 to %6 step %c1_i32 iter_args(%arg9 = %5) -> (vector<1x128xf32>)  : i32 {
      %c8_i32 = arith.constant 8 : i32
      %13 = arith.muli %arg8, %c8_i32 : i32
      %14 = tpu.assume_multiple %13, 8 : i32
      %15 = arith.index_cast %14 : i32 to index
      %c0_10 = arith.constant 0 : index
      %16 = vector.load %arg3[%15, %c0_10] : memref<16x4xf32, #tpu.memory_space<vmem>>, vector<8x4xf32>
      %cst_11 = arith.constant dense<0.000000e+00> : vector<8x128xf32>
      %17 = tpu.matmul %16, %3, %cst_11 {dimension_numbers = #tpu.dot_dimension_numbers<[1], [1], [0], [0], [0, 0, 1, 0], [], []>} : vector<8x4xf32>, vector<128x4xf32>, vector<8x128xf32> -> vector<8x128xf32>
      %18 = arith.index_cast %14 : i32 to index
      %c0_12 = arith.constant 0 : index
      %19 = vector.load %arg2[%18, %c0_12] : memref<16x128xf32, #tpu.memory_space<vmem>>, vector<8x128xf32>
      %cst_13 = arith.constant 2.000000e+00 : f32
      %20 = vector.broadcast %cst_13 : f32 to vector<8x128xf32>
      %21 = arith.mulf %20, %17 : vector<8x128xf32>
      %22 = arith.addf %19, %21 : vector<8x128xf32>
      %23 = arith.mulf %22, %22 : vector<8x128xf32>
      %cst_14 = arith.constant dense<0.000000e+00> : vector<128xf32>
      %24 = vector.multi_reduction <add>, %23, %cst_14 [0] : vector<8x128xf32> to vector<128xf32>
      %25 = vector.shape_cast %24 : vector<128xf32> to vector<1x128xf32>
      %26 = arith.addf %arg9, %25 : vector<1x128xf32>
      scf.yield %26 : vector<1x128xf32>
    }
    %c2_i32_5 = arith.constant 2 : i32
    %8 = arith.addf %4, %7 : vector<1x128xf32>
    %c0_6 = arith.constant 0 : index
    %c0_7 = arith.constant 0 : index
    %9 = vector.load %arg7[%c0_6, %c0_7] : memref<1x128xf32, #tpu.memory_space<vmem>>, vector<1x128xf32>
    tpu.vector_store %arg7[%c0_6, %c0_7], %8 {strides = array<i32>} : memref<1x128xf32, #tpu.memory_space<vmem>>, vector<1x128xf32>,
    %c0_i32_8 = arith.constant 0 : i32
    %10 = arith.cmpi eq, %arg1, %c0_i32_8 : i32
    %11 = arith.extui %10 : i1 to i32
    %c0_i32_9 = arith.constant 0 : i32
    %12 = arith.cmpi ne, %11, %c0_i32_9 : i32
    scf.if %12 {
      %c0_10 = arith.constant 0 : index
      %c0_11 = arith.constant 0 : index
      %13 = vector.load %arg7[%c0_10, %c0_11] : memref<1x128xf32, #tpu.memory_space<vmem>>, vector<1x128xf32>
      %c0_12 = arith.constant 0 : index
      %c0_13 = arith.constant 0 : index
      %14 = vector.load %arg5[%c0_12, %c0_13] : memref<1x128xf32, #tpu.memory_space<vmem>>, vector<1x128xf32>
      %15 = math.rsqrt %13 : vector<1x128xf32>
      %16 = arith.mulf %14, %15 : vector<1x128xf32>
      %cst_14 = arith.constant 0.000000e+00 : f32
      %17 = vector.broadcast %cst_14 : f32 to vector<1x128xf32>
      %18 = arith.cmpf ogt, %13, %17 : vector<1x128xf32>
      %cst_15 = arith.constant 0.000000e+00 : f32
      %19 = vector.broadcast %cst_15 : f32 to vector<1x128xf32>
      %20 = arith.select %18, %16, %19 : vector<1x128xi1>, vector<1x128xf32>
      %c0_16 = arith.constant 0 : index
      %c0_17 = arith.constant 0 : index
      %21 = vector.load %arg6[%c0_16, %c0_17] : memref<1x128xf32, #tpu.memory_space<vmem>>, vector<1x128xf32>
      tpu.vector_store %arg6[%c0_16, %c0_17], %20 {strides = array<i32>} : memref<1x128xf32, #tpu.memory_space<vmem>>, vector<1x128xf32>,
    } else {
    }
    return
  }
  func.func @transform_0(%arg0: i32, %arg1: i32) -> (i32, i32) {
    %c0_i32 = arith.constant 0 : i32
    return %arg1, %arg0 : i32, i32
  }
  func.func @transform_1(%arg0: i32, %arg1: i32) -> (i32, i32) {
    %c0_i32 = arith.constant 0 : i32
    %c0_i32_0 = arith.constant 0 : i32
    return %arg1, %c0_i32 : i32, i32
  }
  func.func @transform_2(%arg0: i32, %arg1: i32) -> (i32, i32) {
    %c0_i32 = arith.constant 0 : i32
    %c0_i32_0 = arith.constant 0 : i32
    return %arg0, %c0_i32 : i32, i32
  }
  func.func @transform_3(%arg0: i32, %arg1: i32) -> (i32, i32) {
    %c0_i32 = arith.constant 0 : i32
    %c0_i32_0 = arith.constant 0 : i32
    return %c0_i32, %arg0 : i32, i32
  }
  func.func @transform_4(%arg0: i32, %arg1: i32) -> (i32, i32) {
    %c0_i32 = arith.constant 0 : i32
    %c0_i32_0 = arith.constant 0 : i32
    return %c0_i32, %arg0 : i32, i32
  }
}

</mosaic_0001>

<llo_original>
// kernel: tpu_custom_call.1
$region0: #{tpu_custom_call.1}
  #allocation0 [shape = 'u32[]', space=smem, size = 0x4, offset = 0x4, fixed_abs, tag = 'smem constant byte address 0x4 - core index']
  #allocation1 [shape = 'u32[144,128]{1,0:T(1,128)}', space=vmem, size = 0x12000, scoped, tag = 'internal scratch']
  #allocation2 [shape = 'f32[1,128]{1,0:T(1,128)}', space=vmem, size = 0x200, scoped, tag = 'scratch operand']
  %s0 = inlined_call_operand.vmem [shape: f32[16,128], index: 0, kind: input, shape index: {}]
  %s1 = inlined_call_operand.vmem [shape: f32[16,4], index: 1, kind: input, shape index: {}]
  %s2 = inlined_call_operand.vmem [shape: f32[128,4], index: 2, kind: input, shape index: {}]
  %s3 = inlined_call_operand.vmem [shape: f32[1,128], index: 3, kind: input, shape index: {}]
  %s4 = inlined_call_operand.hbm [shape: f32[1,128], index: 4, kind: output, shape index: {}]
  %s5 = sld [smem:[#allocation0]]
  $region41: #{tpu_custom_call.1} parent=0
    _
  %s7 = ssub.s32 1, %s5
  %s8 = scalar_select 0, %s7, %s5
  $region1: #{tpu_custom_call.1} parent=0
    #allocation3 [shape = 'u8[512]{0}', space=vmem, size = 0x400, scoped, tag = 'output window, operand 0, single buffered']
    #allocation4 [shape = 's32[1]{0}', space=sflag, size = 0x4, scoped, tag = 'scoped memory for tpu_custom_call.1']
    %9 = vsyncpa [#allocation4], 0
    // Predicated region
    $region2: #{tpu_custom_call.1} parent=1 // pred_check
      _
    $region3: #{tpu_custom_call.1} parent=1 // pred_check_branch
      %11 = sbr.rel (0) target = $region5
    $region4: #{tpu_custom_call.1} parent=1 // pred_region
      _
    $region5: #{tpu_custom_call.1} parent=1 // pred_fallthru
      _
    // Predicated region
    $region6: #{tpu_custom_call.1} parent=1 // pred_check
      _
    $region7: #{tpu_custom_call.1} parent=1 // pred_check_branch
      %13 = sbr.rel (0) target = $region9
    $region8: #{tpu_custom_call.1} parent=1 // pred_region
      _
    $region9: #{tpu_custom_call.1} parent=1 // pred_fallthru
      _
    // Predicated region
    $region10: #{tpu_custom_call.1} parent=1 // pred_check
      _
    $region11: #{tpu_custom_call.1} parent=1 // pred_check_branch
      %15 = sbr.rel (0) target = $region13
    $region12: #{tpu_custom_call.1} parent=1 // pred_region
      _
    $region13: #{tpu_custom_call.1} parent=1 // pred_fallthru
      _
    // Predicated region
    $region14: #{tpu_custom_call.1} parent=1 // pred_check
      _
    $region15: #{tpu_custom_call.1} parent=1 // pred_check_branch
      %17 = sbr.rel (0) target = $region17
    $region16: #{tpu_custom_call.1} parent=1 // pred_region
      _
    $region17: #{tpu_custom_call.1} parent=1 // pred_fallthru
      _
    %p18 = scmp.eq.s32.totalorder 0, 0
    // Predicated region
    $region18: #{tpu_custom_call.1} parent=1 // pred_check
      %p19 = pneg %p18
    $region19: #{tpu_custom_call.1} parent=1 // pred_check_branch
      %21 = sbr.rel (%p19) target = $region21
    $region20: #{tpu_custom_call.1} parent=1 // pred_region
      %22 = vst [vmem:[#allocation2] sm:$0x1] 0.0
    $region21: #{tpu_custom_call.1} parent=1 // pred_fallthru
      _
    %v23 = vld [vmem:[%s2] sm:$0xff]
    %v24 = vld [vmem:[%s2 + $0x8] sm:$0xff]
    %v25 = vld [vmem:[%s2 + $0x10] sm:$0xff]
    %v26 = vld [vmem:[%s2 + $0x18] sm:$0xff]
    %v27 = vld [vmem:[%s2 + $0x20] sm:$0xff]
    %v28 = vld [vmem:[%s2 + $0x28] sm:$0xff]
    %v29 = vld [vmem:[%s2 + $0x30] sm:$0xff]
    %v30 = vld [vmem:[%s2 + $0x38] sm:$0xff]
    %v31 = vld [vmem:[%s2 + $0x40] sm:$0xff]
    %v32 = vld [vmem:[%s2 + $0x48] sm:$0xff]
    %v33 = vld [vmem:[%s2 + $0x50] sm:$0xff]
    %v34 = vld [vmem:[%s2 + $0x58] sm:$0xff]
    %v35 = vld [vmem:[%s2 + $0x60] sm:$0xff]
    %v36 = vld [vmem:[%s2 + $0x68] sm:$0xff]
    %v37 = vld [vmem:[%s2 + $0x70] sm:$0xff]
    %v38 = vld [vmem:[%s2 + $0x78] sm:$0xff]
    %v39 = vld [vmem:[#allocation2] sm:$0x1]
    loop: start=0, step=1, limit=2
    $region22: #{tpu_custom_call.1} parent=1 // loop_pre_header
      _
    $region23: #{tpu_custom_call.1} parent=1 // loop_header
      %s41 = sphi 0, %s45
      %p42 = scmp.ge.s32.totalorder %s41, 2
      %v46 = vphi 0.0, %v183
    $region24: #{tpu_custom_call.1} parent=1 // loop_header_branch
      %44 = sbr.rel (%p42) target = $region28
    $region25: #{tpu_custom_call.1} parent=1 // loop_body
      %s47 = smul.u32 %s41, 8
      %s48 = scalar_lea.vmem %s1, %s47
      %v49 = vld [vmem:[%s48] sm:$0xff]
      %vm50 = vcmask 31744
      %v52 = vsel %vm50, %v49, 0
      %v55 = vsel %vm50, %v23, 0
      %v58 = vsel %vm50, %v24, 0
      %v61 = vsel %vm50, %v25, 0
      %v64 = vsel %vm50, %v26, 0
      %v67 = vsel %vm50, %v27, 0
      %v70 = vsel %vm50, %v28, 0
      %v73 = vsel %vm50, %v29, 0
      %v76 = vsel %vm50, %v30, 0
      %v79 = vsel %vm50, %v31, 0
      %v82 = vsel %vm50, %v32, 0
      %v85 = vsel %vm50, %v33, 0
      %v88 = vsel %vm50, %v34, 0
      %v91 = vsel %vm50, %v35, 0
      %v94 = vsel %vm50, %v36, 0
      %v97 = vsel %vm50, %v37, 0
      %v100 = vsel %vm50, %v38, 0
      %102 = vmatprep.subr.mxu0 0.0
      %103 = vmatpush1.xpose.msra.mxu0 %v55
      %104 = vmatprep.subr.mxu0 0.0
      %105 = vmatpush1.xpose.msra.mxu0 %v58
      %106 = vmatprep.subr.mxu0 0.0
      %107 = vmatpush1.xpose.msra.mxu0 %v61
      %108 = vmatprep.subr.mxu0 0.0
      %109 = vmatpush1.xpose.msra.mxu0 %v64
      %110 = vmatprep.subr.mxu0 0.0
      %111 = vmatpush1.xpose.msra.mxu0 %v67
      %112 = vmatprep.subr.mxu0 0.0
      %113 = vmatpush1.xpose.msra.mxu0 %v70
      %114 = vmatprep.subr.mxu0 0.0
      %115 = vmatpush1.xpose.msra.mxu0 %v73
      %116 = vmatprep.subr.mxu0 0.0
      %117 = vmatpush1.xpose.msra.mxu0 %v76
      %118 = vmatprep.subr.mxu0 0.0
      %119 = vmatpush1.xpose.msra.mxu0 %v79
      %120 = vmatprep.subr.mxu0 0.0
      %121 = vmatpush1.xpose.msra.mxu0 %v82
      %122 = vmatprep.subr.mxu0 0.0
      %123 = vmatpush1.xpose.msra.mxu0 %v85
      %124 = vmatprep.subr.mxu0 0.0
      %125 = vmatpush1.xpose.msra.mxu0 %v88
      %126 = vmatprep.subr.mxu0 0.0
      %127 = vmatpush1.xpose.msra.mxu0 %v91
      %128 = vmatprep.subr.mxu0 0.0
      %129 = vmatpush1.xpose.msra.mxu0 %v94
      %130 = vmatprep.subr.mxu0 0.0
      %131 = vmatpush1.xpose.msra.mxu0 %v97
      %132 = vmatprep.subr.mxu0 0.0
      %133 = vmatpush1.xpose.msra.mxu0 %v100
      %134 = vmatprep.subr.mxu0 0.0
      %135 = vmatpush1.xpose.msra.mxu0 0.0
      %136 = vmatprep.subr.mxu0 0.0
      %137 = vmatpush1.xpose.msra.mxu0 0.0
      %138 = vmatprep.subr.mxu0 0.0
      %139 = vmatpush1.xpose.msra.mxu0 0.0
      %140 = vmatprep.subr.mxu0 0.0
      %141 = vmatpush1.xpose.msra.mxu0 0.0
      %142 = vmatprep.subr.mxu0 0.0
      %143 = vmatpush1.xpose.msra.mxu0 0.0
      %144 = vmatprep.subr.mxu0 0.0
      %145 = vmatpush1.xpose.msra.mxu0 0.0
      %146 = vmatprep.subr.mxu0 0.0
      %147 = vmatpush1.xpose.msra.mxu0 0.0
      %148 = vmatprep.subr.mxu0 0.0
      %149 = vmatpush1.xpose.msra.mxu0 0.0
      %150 = vmatprep.subr.mxu0 0.0
      %151 = vmatpush1.xpose.msra.mxu0 0.0
      %152 = vmatprep.subr.mxu0 0.0
      %153 = vmatpush1.xpose.msra.mxu0 0.0
      %154 = vmatprep.subr.mxu0 0.0
      %155 = vmatpush1.xpose.msra.mxu0 0.0
      %156 = vmatprep.subr.mxu0 0.0
      %157 = vmatpush1.xpose.msra.mxu0 0.0
      %158 = vmatprep.subr.mxu0 0.0
      %159 = vmatpush1.xpose.msra.mxu0 0.0
      %160 = vmatprep.subr.mxu0 0.0
      %161 = vmatpush1.xpose.msra.mxu0 0.0
      %162 = vmatprep.subr.mxu0 0.0
      %163 = vmatpush1.xpose.msra.mxu0 0.0
      %164 = vmatprep.subr.mxu0 0.0
      %165 = vmatpush1.xpose.msra.mxu0 0.0
      %166 = vmatprep.mubr.f32.mxu0 0.0
      %167 = vmatmul.mubr.f32.gmra.mrb[0].mxu0 %v52
      %v168 = vpop.f32.mrb[0].mxu0
      %v169 = vadd.f32 0.0, %v168
      %v170 = vpop.f32.mrb[0].mxu0
      %171 = vdwg.mxu0
      %s172 = scalar_lea.vmem %s0, %s47
      %v173 = vld [vmem:[%s172] sm:$0xff]
      %v174 = vmul.f32 %v169, 2.0
      %v175 = vadd.f32 %v173, %v174
      %v176 = vmul.f32 %v175, %v175
      %v177 = vrot.slane %v176, 4
      %v178 = vadd.f32 %v176, %v177
      %v179 = vrot.slane %v178, 2
      %v180 = vadd.f32 %v178, %v179
      %v181 = vrot.slane %v180, 1
      %v182 = vadd.f32 %v180, %v181
      %v183 = vadd.f32 %v46, %v182
    $region26: #{tpu_custom_call.1} parent=1 // loop_footer
      %s45 = sadd.s32 1, %s41
    $region27: #{tpu_custom_call.1} parent=1 // loop_footer_branch
      %40 = sbr.rel target = $region23
    $region28: #{tpu_custom_call.1} parent=1 // loop_exit
      _
    %v184 = vadd.f32 %v39, %v46
    %185 = vst [vmem:[#allocation2] sm:$0x1] %v184
    // Predicated region
    $region29: #{tpu_custom_call.1} parent=1 // pred_check
      %p186 = pneg %p18
    $region30: #{tpu_custom_call.1} parent=1 // pred_check_branch
      %188 = sbr.rel (%p186) target = $region32
    $region31: #{tpu_custom_call.1} parent=1 // pred_region
      %v189 = vld [vmem:[#allocation2] sm:$0x1]
      %v190 = vld [vmem:[%s3] sm:$0x1]
      %v191 = vrsqrt.pop %v189
      %v192 = vmul.f32 %v190, %v191
      %vm193 = vcmp.gt.f32.partialorder %v189, 0.0
      %v194 = vsel %vm193, %v192, 0.0
      %195 = vst [vmem:[#allocation3] sm:$0x1] %v194
    $region32: #{tpu_custom_call.1} parent=1 // pred_fallthru
      _
    // Predicated region
    $region33: #{tpu_custom_call.1} parent=1 // pred_check
      _
    $region34: #{tpu_custom_call.1} parent=1 // pred_check_branch
      %197 = sbr.rel (0) target = $region36
    $region35: #{tpu_custom_call.1} parent=1 // pred_region
      %s199 = ssub.s32 16, 16
      %200 = vsyncadd [#allocation4], %s199
      %s202 = sshll.u32 [#allocation3], 4
      %s203 = int_to_ptr.vmem [resolvable:$true] %s202
      %205 = dma.vmem_to_hbm [thread:$0]  %s203, 16, %s4, [#allocation4]
    $region36: #{tpu_custom_call.1} parent=1 // pred_fallthru
      _
    // Predicated region
    $region37: #{tpu_custom_call.1} parent=1 // pred_check
      _
    $region38: #{tpu_custom_call.1} parent=1 // pred_check_branch
      %207 = sbr.rel (0) target = $region40
    $region39: #{tpu_custom_call.1} parent=1 // pred_region
      %208 = dma.done [#allocation4], 16
    $region40: #{tpu_custom_call.1} parent=1 // pred_fallthru
      _
    %209 = vsyncpa [#allocation4], 1

</llo_original>
